<compile_context>
chip_gen: v6e
topology: v6e:2x2x1
jax: 0.10.0
libtpu: 0.0.40
codegen_flags: <defaults>
</compile_context>

<pallas_src>
import jax
import jax.numpy as jnp
from jax.experimental import pallas as pl
from jax.experimental.pallas import tpu as pltpu


# --------------------------------------------------------------------------- #
# Kernel
# --------------------------------------------------------------------------- #
def _hsigmoid_kernel(x_ref, o_ref):
    # Upcast to f32 for the affine+clip: the kernel is HBM-bound, so f32 VPU
    # math is free and avoids bf16 rounding of the 1.2 constant.
    x = x_ref[...].astype(jnp.float32)
    y = jnp.clip(1.2 * x + 3.0, 0.0, 6.0) * (1.0 / 6.0)
    o_ref[...] = y.astype(o_ref.dtype)


# --------------------------------------------------------------------------- #
# Wrapper helpers
# --------------------------------------------------------------------------- #
_LANE_CHOICES = (2048, 1024, 512, 256, 128)
_MIN_PALLAS_BYTES = 512 * 1024          # below this, a fused XLA op wins (launch overhead)


def _chip_profile():
    """(target block bytes, min grid steps) per TPU generation.

    device_kind is used instead of pltpu.get_tpu_info() for robustness across
    jax versions; defaults are safe for unknown chips.
    """
    kind = ""
    try:
        kind = jax.devices()[0].device_kind.lower()
    except Exception:  # pragma: no cover - defensive
        pass
    if "7" in kind:                                   # v7x: 3.2 TB/s HBM, 2 TCs, 64 MiB VMEM
        return 8 * 1024 * 1024, 2
    if "v4" in kind or "v5p" in kind or "v5 p" in kind:   # megacore chips: 2 cores
        return 4 * 1024 * 1024, 2
    if "v5" in kind:                                  # v5e: 2 MiB already at the knee,
        return 2 * 1024 * 1024, 1                     # keeps well under 16 MiB scoped default
    return 4 * 1024 * 1024, 1                         # v6e / unknown


def _pick_lane_width(n: int) -> int:
    """Widest lane count (multiple of 128) that divides n (caller ensures n % 128 == 0)."""
    for c in _LANE_CHOICES:
        if n % c == 0:
            return c
    return 128


def _pick_row_tile(rows: int, tr_cap: int, sub: int, min_steps: int) -> int:
    """Row tile: multiple of `sub` (native sublane tile), sized for >= min_steps
    roughly equal grid steps.  A partial last block is masked by Pallas."""
    if rows <= sub * min_steps:
        return rows                                   # single full-height block (always legal)
    steps = max(min_steps, -(-rows // tr_cap))
    if min_steps > 1:
        steps = -(-steps // min_steps) * min_steps    # even step count for the 2 TCs
    tr = -(-rows // steps)
    tr = -(-tr // sub) * sub                          # round up to sublane-tile multiple
    return min(tr, rows)


def _hsigmoid_xla(x: jax.Array) -> jax.Array:
    y = jnp.clip(1.2 * x.astype(jnp.float32) + 3.0, 0.0, 6.0) * (1.0 / 6.0)
    return y.astype(x.dtype)


# --------------------------------------------------------------------------- #
# Public entry point
# --------------------------------------------------------------------------- #
def hsigmoid(x: jax.Array, *, donate_input: bool = False,
             force_pallas: bool = False) -> jax.Array:
    """Elementwise relu6(1.2*x + 3)/6.  Any shape / float dtype.

    donate_input=True aliases the output onto the input HBM buffer
    (only beneficial when the caller actually donates x, e.g. under jit donation).
    """
    orig_shape = x.shape
    orig_dtype = x.dtype
    n = x.size
    itemsize = jnp.dtype(orig_dtype).itemsize

    # Ragged sizes (n % 128 != 0) cannot form a lane-dense slab without an extra
    # pad + slice HBM pass, and tiny tensors are dominated by launch overhead:
    # both go to a single fused XLA elementwise op (1 read + 1 write, roofline).
    if n % 128 != 0:
        return _hsigmoid_xla(x)
    if not force_pallas and n * itemsize < _MIN_PALLAS_BYTES:
        return _hsigmoid_xla(x)

    lanes = _pick_lane_width(n)
    rows = n // lanes
    x2d = x.reshape(rows, lanes)                      # copy-free bitcast reshape

    block_bytes, min_steps = _chip_profile()
    sub = 8 * max(1, 4 // itemsize)                   # 8 (f32) / 16 (bf16) / 32 (int8)
    tr_cap = max(sub, (block_bytes // (lanes * itemsize)) // sub * sub)
    tr = _pick_row_tile(rows, tr_cap, sub, min_steps)
    grid = (pl.cdiv(rows, tr),)

    # in + out, double-buffered, plus headroom; floored at the usual scoped default.
    blk_bytes = tr * lanes * itemsize
    vmem_limit = int(max(16 * 1024 * 1024,
                         min(100 * 1024 * 1024, 4 * blk_bytes + 4 * 1024 * 1024)))

    out2d = pl.pallas_call(
        _hsigmoid_kernel,
        out_shape=jax.ShapeDtypeStruct((rows, lanes), orig_dtype),
        grid_spec=pltpu.PrefetchScalarGridSpec(
            num_scalar_prefetch=0,
            grid=grid,
            in_specs=[pl.BlockSpec((tr, lanes), lambda i: (i, 0))],
            out_specs=pl.BlockSpec((tr, lanes), lambda i: (i, 0)),
        ),
        compiler_params=pltpu.CompilerParams(
            dimension_semantics=("parallel",),        # megacore / v7x dual-TC sharding
            vmem_limit_bytes=vmem_limit,
        ),
        cost_estimate=pl.CostEstimate(
            flops=3 * n,
            transcendentals=0,
            bytes_accessed=2 * n * itemsize,
        ),
        input_output_aliases=({0: 0} if donate_input else {}),
    )(x2d)

    return out2d.reshape(orig_shape)


def hsigmoid_ref(x: jax.Array) -> jax.Array:
    return jnp.clip(1.2 * x.astype(jnp.float32) + 3.0, 0.0, 6.0) / 6.0


# --------------------------------------------------------------------------- #
# Self-test
# --------------------------------------------------------------------------- #
if __name__ == "__main__":
    k1, k2, k3 = jax.random.split(jax.random.PRNGKey(0), 3)

    # 1) NCHW conv activation (aligned, f32) — forced through the Pallas kernel.
    x = jax.random.normal(k1, (2, 4, 16, 16), dtype=jnp.float32) * 3.0
    y = jax.block_until_ready(hsigmoid(x, force_pallas=True))
    y_ref = hsigmoid_ref(x).astype(x.dtype)
    assert y.shape == x.shape and y.dtype == x.dtype
    assert jnp.allclose(y, y_ref, atol=1e-6, rtol=1e-6), "f32 mismatch vs reference"

    # 2) bf16 aligned, multi-row slab (exercises masked partial last row-block).
    xb = (jax.random.normal(k2, (2, 16, 40, 40), dtype=jnp.float32) * 3.0
          ).astype(jnp.bfloat16)
    yb = jax.block_until_ready(hsigmoid(xb, force_pallas=True))
    yb_ref = hsigmoid_ref(xb.astype(jnp.float32))
    assert yb.shape == xb.shape and yb.dtype == xb.dtype
    assert jnp.allclose(yb.astype(jnp.float32), yb_ref, atol=1e-2, rtol=1e-2), \
        "bf16 mismatch vs reference"

    # 3) Ragged shape -> XLA fast path (no pad / slice HBM passes).
    xr = jax.random.normal(k3, (3, 5, 7, 11), dtype=jnp.float32) * 3.0
    yr = jax.block_until_ready(hsigmoid(xr))
    assert jnp.allclose(yr, hsigmoid_ref(xr), atol=1e-6, rtol=1e-6), "ragged mismatch"

    print("KERNEL_OK")
</pallas_src>

<mosaic_0001>
module attributes {stable_mosaic.version = 11 : i64} {
  func.func @_hsigmoid_kernel(%arg0: i32, %arg1: memref<1x2048xf32, #tpu.memory_space<vmem>>, %arg2: memref<1x2048xf32, #tpu.memory_space<vmem>>) attributes {dimension_semantics = [#tpu.dimension_semantics<parallel>], iteration_bounds = array<i64: 1>, scalar_prefetch = 0 : i64, scratch_operands = 0 : i64, tpu.core_type = #tpu.core_type<tc>, window_params = [{transform_indices = @transform_0, window_bounds = array<i64: 1, 2048>}, {transform_indices = @transform_1, window_bounds = array<i64: 1, 2048>}]} {
    %c0 = arith.constant 0 : index
    %c0_0 = arith.constant 0 : index
    %0 = vector.load %arg1[%c0, %c0_0] : memref<1x2048xf32, #tpu.memory_space<vmem>>, vector<1x2048xf32>
    %cst = arith.constant 1.200000e+00 : f32
    %1 = vector.broadcast %cst : f32 to vector<1x2048xf32>
    %2 = arith.mulf %1, %0 : vector<1x2048xf32>
    %cst_1 = arith.constant 3.000000e+00 : f32
    %3 = vector.broadcast %cst_1 : f32 to vector<1x2048xf32>
    %4 = arith.addf %2, %3 : vector<1x2048xf32>
    %cst_2 = arith.constant 0.000000e+00 : f32
    %cst_3 = arith.constant 6.000000e+00 : f32
    %5 = vector.broadcast %cst_2 : f32 to vector<1x2048xf32>
    %6 = arith.maximumf %5, %4 : vector<1x2048xf32>
    %7 = vector.broadcast %cst_3 : f32 to vector<1x2048xf32>
    %8 = arith.minimumf %7, %6 : vector<1x2048xf32>
    %cst_4 = arith.constant 0.166666672 : f32
    %9 = vector.broadcast %cst_4 : f32 to vector<1x2048xf32>
    %10 = arith.mulf %8, %9 : vector<1x2048xf32>
    %c0_5 = arith.constant 0 : index
    %c0_6 = arith.constant 0 : index
    %11 = vector.load %arg2[%c0_5, %c0_6] : memref<1x2048xf32, #tpu.memory_space<vmem>>, vector<1x2048xf32>
    tpu.vector_store %arg2[%c0_5, %c0_6], %10 {strides = array<i32>} : memref<1x2048xf32, #tpu.memory_space<vmem>>, vector<1x2048xf32>,
    return
  }
  func.func @transform_0(%arg0: i32) -> (i32, i32) {
    %c0_i32 = arith.constant 0 : i32
    %c0_i32_0 = arith.constant 0 : i32
    return %arg0, %c0_i32 : i32, i32
  }
  func.func @transform_1(%arg0: i32) -> (i32, i32) {
    %c0_i32 = arith.constant 0 : i32
    %c0_i32_0 = arith.constant 0 : i32
    return %arg0, %c0_i32 : i32, i32
  }
}

</mosaic_0001>

<llo_original>
// kernel: tpu_custom_call.1
$region0: #{tpu_custom_call.1}
  #allocation0 [shape = 'u32[]', space=smem, size = 0x4, offset = 0x4, fixed_abs, tag = 'smem constant byte address 0x4 - core index']
  #allocation1 [shape = 'u32[144,128]{1,0:T(1,128)}', space=vmem, size = 0x12000, scoped, tag = 'internal scratch']
  %s0 = inlined_call_operand.hbm [shape: f32[1,2048], index: 0, kind: input, shape index: {}]
  %s1 = inlined_call_operand.hbm [shape: f32[1,2048], index: 1, kind: output, shape index: {}]
  %s2 = sld [smem:[#allocation0]]
  $region18: #{tpu_custom_call.1} parent=0
    _
  %s4 = ssub.s32 1, %s2
  %s5 = scalar_select 0, %s4, %s2
  $region1: #{tpu_custom_call.1} parent=0
    #allocation2 [shape = 'u8[8192]{0}', space=vmem, size = 0x2000, scoped, tag = 'input window, operand 0, single buffered']
    #allocation3 [shape = 's32[1]{0}', space=sflag, size = 0x4, scoped, tag = 'scoped memory for tpu_custom_call.1']
    #allocation4 [shape = 's32[1]{0}', space=sflag, size = 0x4, scoped, tag = 'scoped memory for tpu_custom_call.1']
    #allocation5 [shape = 'u8[8192]{0}', space=vmem, size = 0x2000, scoped, tag = 'output window, operand 0, single buffered']
    %6 = vsyncpa [#allocation3], 0
    %7 = vsyncpa [#allocation4], 0
    // Predicated region
    $region2: #{tpu_custom_call.1} parent=1 // pred_check
      _
    $region3: #{tpu_custom_call.1} parent=1 // pred_check_branch
      %9 = sbr.rel (0) target = $region5
    $region4: #{tpu_custom_call.1} parent=1 // pred_region
      %s11 = ssub.s32 256, 256
      %12 = vsyncadd [#allocation3], %s11
      %s14 = sshll.u32 [#allocation2], 4
      %s15 = int_to_ptr.vmem [resolvable:$true] %s14
      %17 = dma.hbm_to_vmem [thread:$0]  %s0, 256, %s15, [#allocation3]
    $region5: #{tpu_custom_call.1} parent=1 // pred_fallthru
      _
    // Predicated region
    $region6: #{tpu_custom_call.1} parent=1 // pred_check
      _
    $region7: #{tpu_custom_call.1} parent=1 // pred_check_branch
      %19 = sbr.rel (0) target = $region9
    $region8: #{tpu_custom_call.1} parent=1 // pred_region
      %20 = dma.done [#allocation3], 256
    $region9: #{tpu_custom_call.1} parent=1 // pred_fallthru
      _
    %v21 = vld [vmem:[#allocation2] sm:$0xff]
    %v22 = vld [vmem:[#allocation2 + $0x8] sm:$0xff]
    %v23 = vmul.f32 %v21, 1.2
    %v24 = vmul.f32 %v22, 1.2
    %v25 = vadd.f32 %v23, 3.0
    %v26 = vadd.f32 %v24, 3.0
    %v27 = vmax.f32 %v25, 0.0
    %v28 = vmax.f32 %v26, 0.0
    %v29 = vmin.f32 %v27, 6.0
    %v30 = vmin.f32 %v28, 6.0
    %v31 = vmul.f32 %v29, 0.16666667
    %v32 = vmul.f32 %v30, 0.16666667
    %33 = vst [vmem:[#allocation5] sm:$0xff] %v31
    %34 = vst [vmem:[#allocation5 + $0x8] sm:$0xff] %v32
    // Predicated region
    $region10: #{tpu_custom_call.1} parent=1 // pred_check
      _
    $region11: #{tpu_custom_call.1} parent=1 // pred_check_branch
      %36 = sbr.rel (0) target = $region13
    $region12: #{tpu_custom_call.1} parent=1 // pred_region
      %s38 = ssub.s32 256, 256
      %39 = vsyncadd [#allocation4], %s38
      %s41 = sshll.u32 [#allocation5], 4
      %s42 = int_to_ptr.vmem [resolvable:$true] %s41
      %44 = dma.vmem_to_hbm [thread:$0]  %s42, 256, %s1, [#allocation4]
    $region13: #{tpu_custom_call.1} parent=1 // pred_fallthru
      _
    // Predicated region
    $region14: #{tpu_custom_call.1} parent=1 // pred_check
      _
    $region15: #{tpu_custom_call.1} parent=1 // pred_check_branch
      %46 = sbr.rel (0) target = $region17
    $region16: #{tpu_custom_call.1} parent=1 // pred_region
      %47 = dma.done [#allocation4], 256
    $region17: #{tpu_custom_call.1} parent=1 // pred_fallthru
      _
    %48 = vsyncpa [#allocation3], 1
    %49 = vsyncpa [#allocation4], 1

</llo_original>
